<compile_context>
chip_gen: v7x
topology: tpu7x:2x2x1
jax: 0.10.0
libtpu: 0.0.40
codegen_flags: <defaults>
</compile_context>

<pallas_src>
import math

import numpy as np
import jax
import jax.numpy as jnp
from jax.experimental import pallas as pl
from jax.experimental.pallas import tpu as pltpu


def _round_up(x, m):
    return ((x + m - 1) // m) * m


def conv2dt_forward(x, w, b, out_shape, stride, dilation):
    """Equivalent of Conv2dT.forward: ConvTranspose2d(pad=0, out_pad=0) + width crop."""
    N, Cin, Hin, Win = x.shape
    _, Cout, kH, kW = w.shape
    s, d = int(stride), int(dilation)

    Hout = (Hin - 1) * s + d * (kH - 1) + 1
    Wout = (Win - 1) * s + d * (kW - 1) + 1

    # ---- plain-JAX glue: zero-stuff + pad (exact, cheap) -------------------
    Hd = (Hin - 1) * s + 1
    Wd = (Win - 1) * s + 1
    ph = d * (kH - 1)
    pw = d * (kW - 1)
    Hp = Hd + 2 * ph            # = Hout + ph
    Wp = Wd + 2 * pw            # = Wout + pw

    xb = x.astype(jnp.bfloat16)
    if s == 1:
        xd = xb
    else:
        xd = jnp.zeros((N, Cin, Hd, Wd), jnp.bfloat16).at[:, :, ::s, ::s].set(xb)
    xp = jnp.pad(xd, ((0, 0), (0, 0), (ph, ph), (pw, pw)))     # (N, Cin, Hp, Wp)

    # Flatten (H, W) per batch element.  For kernel tap (kh, kw), the value
    # needed by "extended" output pixel m = ho*Wp + we is flat element
    # m + (kh*d*Wp + kw*d): patch extraction becomes a static lane shift.
    # The last `pw` columns of each extended output row are row-wrap junk and
    # are discarded after the kernel.
    Me = Hout * Wp                          # extended output pixels / image
    SPAN = ph * Wp + pw                     # largest static tap offset
    TM = min(1024, _round_up(Me, 128))      # lane tile (multiple of 128)
    num_m = -(-Me // TM)                    # ceil div
    SPAN_PAD = _round_up(max(SPAN, 1), 128)
    TMW = TM + SPAN_PAD                     # window consumed per grid step
    Lpad = num_m * TM + SPAN_PAD

    Cin8 = _round_up(Cin, 8)
    C8 = _round_up(Cout, 8)
    KK = kH * kW

    # TODO(synk): the per-batch flat input (Cin8 x Lpad bf16) is kept fully
    # resident in VMEM; for very large images tile the L axis (manual DMA).
    x_flat = jnp.pad(xp.reshape(N, Cin, Hp * Wp),
                     ((0, 0), (0, Cin8 - Cin), (0, Lpad - Hp * Wp)))

    # Flipped kernel as (tap, Cout, Cin) so out = W @ X with M on lanes.
    wf = w[:, :, ::-1, ::-1]                                    # (Cin,Cout,kH,kW)
    wt = wf.transpose(2, 3, 1, 0).reshape(KK, Cout, Cin)        # (KK,Cout,Cin)
    w_p = jnp.pad(wt.astype(jnp.bfloat16),
                  ((0, 0), (0, C8 - Cout), (0, Cin8 - Cin)))    # (KK,C8,Cin8)
    b_p = jnp.pad(b.astype(jnp.float32), (0, C8 - Cout)).reshape(C8, 1)

    offsets = tuple(kh * d * Wp + kw * d for kh in range(kH) for kw in range(kW))

    def kernel(x_ref, w_ref, b_ref, o_ref):
        j = pl.program_id(1)
        start = pl.multiple_of(j * TM, 128)              # 128-aligned lane start
        win = x_ref[:, pl.ds(start, TMW)]                # (Cin8, TMW) bf16
        bias = b_ref[...]                                # (C8, 1) f32
        acc = jnp.zeros((C8, TM), jnp.float32)
        for kidx, off in enumerate(offsets):             # static unroll (kH*kW)
            a = win[:, off:off + TM]                     # (Cin8, TM) bf16
            acc = acc + jnp.dot(w_ref[kidx], a,
                                preferred_element_type=jnp.float32)
        o_ref[...] = acc + bias                          # bias add in f32

    flops = 2 * N * Hout * Wout * KK * Cin * Cout
    bytes_accessed = (N * Cin8 * Lpad * 2 + KK * C8 * Cin8 * 2 + C8 * 4
                      + N * C8 * num_m * TM * 4)

    out_ext = pl.pallas_call(
        kernel,
        out_shape=jax.ShapeDtypeStruct((N, C8, num_m * TM), jnp.float32),
        grid=(N, num_m),
        in_specs=[
            pl.BlockSpec((None, Cin8, Lpad), lambda n, j: (n, 0, 0)),
            pl.BlockSpec((KK, C8, Cin8), lambda n, j: (0, 0, 0)),
            pl.BlockSpec((C8, 1), lambda n, j: (0, 0)),
        ],
        out_specs=pl.BlockSpec((None, C8, TM), lambda n, j: (n, 0, j)),
        compiler_params=pltpu.CompilerParams(
            dimension_semantics=("parallel", "parallel")),
        cost_estimate=pl.CostEstimate(flops=flops, transcendentals=0,
                                      bytes_accessed=bytes_accessed),
    )(x_flat, w_p, b_p)

    # strip channel / pixel padding, drop row-wrap junk columns, crop width
    out = out_ext[:, :Cout, :Me].reshape(N, Cout, Hout, Wp)
    pad_w = Wout - int(out_shape[1])
    left = pad_w // 2
    right = pad_w - left
    return out[:, :, :, left:Wout - right]


def _ref_conv2dt(x, w, b, out_shape, stride, dilation):
    """Loop-based NumPy reference of ConvTranspose2d + width crop (f64 accum)."""
    x = np.asarray(x, np.float64)
    w = np.asarray(w, np.float64)
    b = np.asarray(b, np.float64)
    N, Cin, Hin, Win = x.shape
    _, Cout, kH, kW = w.shape
    s, d = stride, dilation
    Hout = (Hin - 1) * s + d * (kH - 1) + 1
    Wout = (Win - 1) * s + d * (kW - 1) + 1
    out = np.zeros((N, Cout, Hout, Wout), np.float64) + b.reshape(1, Cout, 1, 1)
    for n in range(N):
        for ci in range(Cin):
            for co in range(Cout):
                for i in range(Hin):
                    for j in range(Win):
                        for kh in range(kH):
                            for kw in range(kW):
                                out[n, co, i * s + kh * d, j * s + kw * d] += (
                                    x[n, ci, i, j] * w[ci, co, kh, kw])
    pad_w = Wout - int(out_shape[1])
    left = pad_w // 2
    right = pad_w - left
    return out[:, :, :, left:Wout - right].astype(np.float32)


if __name__ == "__main__":
    # module config: Conv2dT(in_channel=4, out_channel=4, kernel_size=3,
    #                        out_shape=(17, 15), stride=2, dilation=1)
    N, Cin, Cout = 2, 4, 4
    Hin = Win = 8
    k, stride, dilation = 3, 2, 1
    out_shape = (17, 15)   # conv output is 17x17; module crops width to 15

    key = jax.random.PRNGKey(0)
    kx, kw_, kb = jax.random.split(key, 3)
    x = jax.random.normal(kx, (N, Cin, Hin, Win), dtype=jnp.float32)
    fan = Cin * k * k
    w = jax.random.normal(kw_, (Cin, Cout, k, k), dtype=jnp.float32) / math.sqrt(fan)
    b = jax.random.normal(kb, (Cout,), dtype=jnp.float32) * 0.1

    fwd = jax.jit(conv2dt_forward,
                  static_argnames=("out_shape", "stride", "dilation"))
    out = fwd(x, w, b, out_shape=out_shape, stride=stride, dilation=dilation)
    out = jax.block_until_ready(out)

    # The kernel computes with bf16 inputs / f32 accumulation, so compare
    # against a reference fed the identical bf16-rounded inputs.
    xq = np.asarray(x.astype(jnp.bfloat16).astype(jnp.float32))
    wq = np.asarray(w.astype(jnp.bfloat16).astype(jnp.float32))
    ref = _ref_conv2dt(xq, wq, np.asarray(b), out_shape, stride, dilation)

    assert out.shape == ref.shape, (out.shape, ref.shape)
    assert np.allclose(np.asarray(out), ref, rtol=1e-4, atol=1e-4), "mismatch vs reference"
    print("KERNEL_OK")
</pallas_src>

<mosaic_0001>
module attributes {stable_mosaic.version = 11 : i64} {
  func.func @kernel(%arg0: i32, %arg1: i32, %arg2: memref<1x8x512xbf16, #tpu.memory_space<vmem>>, %arg3: memref<9x8x8xbf16, #tpu.memory_space<vmem>>, %arg4: memref<8x1xf32, #tpu.memory_space<vmem>>, %arg5: memref<1x8x384xf32, #tpu.memory_space<vmem>>) attributes {dimension_semantics = [#tpu.dimension_semantics<parallel>, #tpu.dimension_semantics<parallel>], iteration_bounds = array<i64: 2, 1>, scalar_prefetch = 0 : i64, scratch_operands = 0 : i64, tpu.core_type = #tpu.core_type<tc>, window_params = [{transform_indices = @transform_0, window_bounds = array<i64: 1, 8, 512>}, {pipeline_mode = #tpu.pipeline_mode<synchronous>, transform_indices = @transform_1, window_bounds = array<i64: 9, 8, 8>}, {pipeline_mode = #tpu.pipeline_mode<synchronous>, transform_indices = @transform_2, window_bounds = array<i64: 8, 1>}, {transform_indices = @transform_3, window_bounds = array<i64: 1, 8, 384>}]} {
    %c384_i32 = arith.constant 384 : i32
    %0 = arith.muli %arg1, %c384_i32 : i32
    %1 = tpu.assume_multiple %0, 128 : i32
    %c0 = arith.constant 0 : index
    %c0_0 = arith.constant 0 : index
    %2 = arith.index_cast %1 : i32 to index
    %3 = vector.load %arg2[%c0, %c0_0, %2] : memref<1x8x512xbf16, #tpu.memory_space<vmem>>, vector<1x8x512xbf16>
    %4 = vector.shape_cast %3 : vector<1x8x512xbf16> to vector<8x512xbf16>
    %c0_1 = arith.constant 0 : index
    %c0_2 = arith.constant 0 : index
    %5 = vector.load %arg4[%c0_1, %c0_2] : memref<8x1xf32, #tpu.memory_space<vmem>>, vector<8x1xf32>
    %cst = arith.constant 0.000000e+00 : f32
    %6 = vector.broadcast %cst : f32 to vector<8x384xf32>
    %7 = vector.extract_strided_slice %4 {offsets = [0, 0], sizes = [8, 384], strides = [1, 1]} : vector<8x512xbf16> to vector<8x384xbf16>
    %c0_3 = arith.constant 0 : index
    %c0_4 = arith.constant 0 : index
    %c0_5 = arith.constant 0 : index
    %8 = vector.load %arg3[%c0_3, %c0_4, %c0_5] : memref<9x8x8xbf16, #tpu.memory_space<vmem>>, vector<1x8x8xbf16>
    %9 = vector.shape_cast %8 : vector<1x8x8xbf16> to vector<8x8xbf16>
    %cst_6 = arith.constant dense<0.000000e+00> : vector<8x384xf32>
    %10 = tpu.matmul %9, %7, %cst_6 {dimension_numbers = #tpu.dot_dimension_numbers<[1], [0], [0], [1], [0, 0, 1, 1], [], []>} : vector<8x8xbf16>, vector<8x384xbf16>, vector<8x384xf32> -> vector<8x384xf32>
    %11 = arith.addf %6, %10 : vector<8x384xf32>
    %12 = vector.extract_strided_slice %4 {offsets = [0, 1], sizes = [8, 384], strides = [1, 1]} : vector<8x512xbf16> to vector<8x384xbf16>
    %c1 = arith.constant 1 : index
    %c0_7 = arith.constant 0 : index
    %c0_8 = arith.constant 0 : index
    %13 = vector.load %arg3[%c1, %c0_7, %c0_8] : memref<9x8x8xbf16, #tpu.memory_space<vmem>>, vector<1x8x8xbf16>
    %14 = vector.shape_cast %13 : vector<1x8x8xbf16> to vector<8x8xbf16>
    %cst_9 = arith.constant dense<0.000000e+00> : vector<8x384xf32>
    %15 = tpu.matmul %14, %12, %cst_9 {dimension_numbers = #tpu.dot_dimension_numbers<[1], [0], [0], [1], [0, 0, 1, 1], [], []>} : vector<8x8xbf16>, vector<8x384xbf16>, vector<8x384xf32> -> vector<8x384xf32>
    %16 = arith.addf %11, %15 : vector<8x384xf32>
    %17 = vector.extract_strided_slice %4 {offsets = [0, 2], sizes = [8, 384], strides = [1, 1]} : vector<8x512xbf16> to vector<8x384xbf16>
    %c2 = arith.constant 2 : index
    %c0_10 = arith.constant 0 : index
    %c0_11 = arith.constant 0 : index
    %18 = vector.load %arg3[%c2, %c0_10, %c0_11] : memref<9x8x8xbf16, #tpu.memory_space<vmem>>, vector<1x8x8xbf16>
    %19 = vector.shape_cast %18 : vector<1x8x8xbf16> to vector<8x8xbf16>
    %cst_12 = arith.constant dense<0.000000e+00> : vector<8x384xf32>
    %20 = tpu.matmul %19, %17, %cst_12 {dimension_numbers = #tpu.dot_dimension_numbers<[1], [0], [0], [1], [0, 0, 1, 1], [], []>} : vector<8x8xbf16>, vector<8x384xbf16>, vector<8x384xf32> -> vector<8x384xf32>
    %21 = arith.addf %16, %20 : vector<8x384xf32>
    %22 = vector.extract_strided_slice %4 {offsets = [0, 19], sizes = [8, 384], strides = [1, 1]} : vector<8x512xbf16> to vector<8x384xbf16>
    %c3 = arith.constant 3 : index
    %c0_13 = arith.constant 0 : index
    %c0_14 = arith.constant 0 : index
    %23 = vector.load %arg3[%c3, %c0_13, %c0_14] : memref<9x8x8xbf16, #tpu.memory_space<vmem>>, vector<1x8x8xbf16>
    %24 = vector.shape_cast %23 : vector<1x8x8xbf16> to vector<8x8xbf16>
    %cst_15 = arith.constant dense<0.000000e+00> : vector<8x384xf32>
    %25 = tpu.matmul %24, %22, %cst_15 {dimension_numbers = #tpu.dot_dimension_numbers<[1], [0], [0], [1], [0, 0, 1, 1], [], []>} : vector<8x8xbf16>, vector<8x384xbf16>, vector<8x384xf32> -> vector<8x384xf32>
    %26 = arith.addf %21, %25 : vector<8x384xf32>
    %27 = vector.extract_strided_slice %4 {offsets = [0, 20], sizes = [8, 384], strides = [1, 1]} : vector<8x512xbf16> to vector<8x384xbf16>
    %c4 = arith.constant 4 : index
    %c0_16 = arith.constant 0 : index
    %c0_17 = arith.constant 0 : index
    %28 = vector.load %arg3[%c4, %c0_16, %c0_17] : memref<9x8x8xbf16, #tpu.memory_space<vmem>>, vector<1x8x8xbf16>
    %29 = vector.shape_cast %28 : vector<1x8x8xbf16> to vector<8x8xbf16>
    %cst_18 = arith.constant dense<0.000000e+00> : vector<8x384xf32>
    %30 = tpu.matmul %29, %27, %cst_18 {dimension_numbers = #tpu.dot_dimension_numbers<[1], [0], [0], [1], [0, 0, 1, 1], [], []>} : vector<8x8xbf16>, vector<8x384xbf16>, vector<8x384xf32> -> vector<8x384xf32>
    %31 = arith.addf %26, %30 : vector<8x384xf32>
    %32 = vector.extract_strided_slice %4 {offsets = [0, 21], sizes = [8, 384], strides = [1, 1]} : vector<8x512xbf16> to vector<8x384xbf16>
    %c5 = arith.constant 5 : index
    %c0_19 = arith.constant 0 : index
    %c0_20 = arith.constant 0 : index
    %33 = vector.load %arg3[%c5, %c0_19, %c0_20] : memref<9x8x8xbf16, #tpu.memory_space<vmem>>, vector<1x8x8xbf16>
    %34 = vector.shape_cast %33 : vector<1x8x8xbf16> to vector<8x8xbf16>
    %cst_21 = arith.constant dense<0.000000e+00> : vector<8x384xf32>
    %35 = tpu.matmul %34, %32, %cst_21 {dimension_numbers = #tpu.dot_dimension_numbers<[1], [0], [0], [1], [0, 0, 1, 1], [], []>} : vector<8x8xbf16>, vector<8x384xbf16>, vector<8x384xf32> -> vector<8x384xf32>
    %36 = arith.addf %31, %35 : vector<8x384xf32>
    %37 = vector.extract_strided_slice %4 {offsets = [0, 38], sizes = [8, 384], strides = [1, 1]} : vector<8x512xbf16> to vector<8x384xbf16>
    %c6 = arith.constant 6 : index
    %c0_22 = arith.constant 0 : index
    %c0_23 = arith.constant 0 : index
    %38 = vector.load %arg3[%c6, %c0_22, %c0_23] : memref<9x8x8xbf16, #tpu.memory_space<vmem>>, vector<1x8x8xbf16>
    %39 = vector.shape_cast %38 : vector<1x8x8xbf16> to vector<8x8xbf16>
    %cst_24 = arith.constant dense<0.000000e+00> : vector<8x384xf32>
    %40 = tpu.matmul %39, %37, %cst_24 {dimension_numbers = #tpu.dot_dimension_numbers<[1], [0], [0], [1], [0, 0, 1, 1], [], []>} : vector<8x8xbf16>, vector<8x384xbf16>, vector<8x384xf32> -> vector<8x384xf32>
    %41 = arith.addf %36, %40 : vector<8x384xf32>
    %42 = vector.extract_strided_slice %4 {offsets = [0, 39], sizes = [8, 384], strides = [1, 1]} : vector<8x512xbf16> to vector<8x384xbf16>
    %c7 = arith.constant 7 : index
    %c0_25 = arith.constant 0 : index
    %c0_26 = arith.constant 0 : index
    %43 = vector.load %arg3[%c7, %c0_25, %c0_26] : memref<9x8x8xbf16, #tpu.memory_space<vmem>>, vector<1x8x8xbf16>
    %44 = vector.shape_cast %43 : vector<1x8x8xbf16> to vector<8x8xbf16>
    %cst_27 = arith.constant dense<0.000000e+00> : vector<8x384xf32>
    %45 = tpu.matmul %44, %42, %cst_27 {dimension_numbers = #tpu.dot_dimension_numbers<[1], [0], [0], [1], [0, 0, 1, 1], [], []>} : vector<8x8xbf16>, vector<8x384xbf16>, vector<8x384xf32> -> vector<8x384xf32>
    %46 = arith.addf %41, %45 : vector<8x384xf32>
    %47 = vector.extract_strided_slice %4 {offsets = [0, 40], sizes = [8, 384], strides = [1, 1]} : vector<8x512xbf16> to vector<8x384xbf16>
    %c8 = arith.constant 8 : index
    %c0_28 = arith.constant 0 : index
    %c0_29 = arith.constant 0 : index
    %48 = vector.load %arg3[%c8, %c0_28, %c0_29] : memref<9x8x8xbf16, #tpu.memory_space<vmem>>, vector<1x8x8xbf16>
    %49 = vector.shape_cast %48 : vector<1x8x8xbf16> to vector<8x8xbf16>
    %cst_30 = arith.constant dense<0.000000e+00> : vector<8x384xf32>
    %50 = tpu.matmul %49, %47, %cst_30 {dimension_numbers = #tpu.dot_dimension_numbers<[1], [0], [0], [1], [0, 0, 1, 1], [], []>} : vector<8x8xbf16>, vector<8x384xbf16>, vector<8x384xf32> -> vector<8x384xf32>
    %51 = arith.addf %46, %50 : vector<8x384xf32>
    %52 = vector.broadcast %5 : vector<8x1xf32> to vector<8x384xf32>
    %53 = arith.addf %51, %52 : vector<8x384xf32>
    %c0_31 = arith.constant 0 : index
    %c0_32 = arith.constant 0 : index
    %c0_33 = arith.constant 0 : index
    %54 = vector.load %arg5[%c0_31, %c0_32, %c0_33] : memref<1x8x384xf32, #tpu.memory_space<vmem>>, vector<1x8x384xf32>
    %55 = vector.shape_cast %54 : vector<1x8x384xf32> to vector<8x384xf32>
    %56 = vector.shape_cast %53 : vector<8x384xf32> to vector<1x8x384xf32>
    tpu.vector_store %arg5[%c0_31, %c0_32, %c0_33], %56 {strides = array<i32>} : memref<1x8x384xf32, #tpu.memory_space<vmem>>, vector<1x8x384xf32>,
    return
  }
  func.func @transform_0(%arg0: i32, %arg1: i32) -> (i32, i32, i32) {
    %c0_i32 = arith.constant 0 : i32
    %c0_i32_0 = arith.constant 0 : i32
    %c0_i32_1 = arith.constant 0 : i32
    return %arg0, %c0_i32, %c0_i32_0 : i32, i32, i32
  }
  func.func @transform_1(%arg0: i32, %arg1: i32) -> (i32, i32, i32) {
    %c0_i32 = arith.constant 0 : i32
    %c0_i32_0 = arith.constant 0 : i32
    %c0_i32_1 = arith.constant 0 : i32
    %c0_i32_2 = arith.constant 0 : i32
    return %c0_i32, %c0_i32_0, %c0_i32_1 : i32, i32, i32
  }
  func.func @transform_2(%arg0: i32, %arg1: i32) -> (i32, i32) {
    %c0_i32 = arith.constant 0 : i32
    %c0_i32_0 = arith.constant 0 : i32
    %c0_i32_1 = arith.constant 0 : i32
    return %c0_i32, %c0_i32_0 : i32, i32
  }
  func.func @transform_3(%arg0: i32, %arg1: i32) -> (i32, i32, i32) {
    %c0_i32 = arith.constant 0 : i32
    %c0_i32_0 = arith.constant 0 : i32
    return %arg0, %c0_i32, %arg1 : i32, i32, i32
  }
}

</mosaic_0001>

<llo_original>
// kernel: conv2dt_forward.1
$region0: #{conv2dt_forward.1}
  #allocation0 [shape = 'u32[]', space=smem, size = 0x4, offset = 0x4, fixed_abs, tag = 'smem constant byte address 0x4 - core index']
  #allocation1 [shape = 'u32[144,128]{1,0:T(1,128)}', space=vmem, size = 0x12000, scoped, tag = 'internal scratch']
  %s0 = inlined_call_operand.vmem [shape: bf16[2,8,512], index: 0, kind: input, shape index: {}]
  %s1 = inlined_call_operand.vmem [shape: bf16[9,8,8], index: 1, kind: input, shape index: {}]
  %s2 = inlined_call_operand.vmem [shape: f32[8,1], index: 2, kind: input, shape index: {}]
  %s3 = inlined_call_operand.vmem [shape: f32[2,8,384], index: 3, kind: output, shape index: {}]
  %s4 = sld [smem:[#allocation0]]
  $region45: #{conv2dt_forward.1} parent=0
    _
  %s6 = ssub.s32 1, %s4
  %s7 = scalar_select 0, %s6, %s4
  loop: start=0, step=1, limit=4
  $region2: #{conv2dt_forward.1} parent=0 // loop_pre_header
    _
  $region3: #{conv2dt_forward.1} parent=0 // loop_header
    %s9 = sphi 0, %s13
    %p10 = scmp.ge.s32.totalorder %s9, 4
    %s16 = sphi 0, %s28
    %s17 = sphi 0, %s24
    %s18 = sphi 0, %s16
    %s19 = sphi 0, %s17
    %s20 = sphi 0, %s18
    %s21 = sphi 0, %s19
    %s31 = sphi 0, %s33
    %s34 = sphi 0, %s31
    %s35 = sphi 0, %s34
    %s51 = sphi 0, %s35
    %s55 = sphi 0, %s55
    %s57 = sphi 0, %s55
    %s58 = sphi 0, %s57
    %s72 = sphi 0, %s58
    %s76 = sphi 0, %s76
    %s78 = sphi 0, %s76
    %s79 = sphi 0, %s78
    %s93 = sphi 0, %s79
    %s101 = sphi 0, %s103
    %s104 = sphi 0, %s101
    %s105 = sphi 0, %s104
    %s121 = sphi 0, %s105
  $region4: #{conv2dt_forward.1} parent=0 // loop_header_branch
    %12 = sbr.rel (%p10) target = $region8
  $region5: #{conv2dt_forward.1} parent=0 // loop_body
    %s14 = ssub.s32 %s9, 1
    %s15 = ssub.s32 %s9, 2
    %s22 = sadd.s32 1, %s17
    %p23 = scmp.ge.s32.totalorder %s22, 1
    %s24 = scalar_select %p23, 0, %s22
    %s25 = sadd.s32 1, %s16
    %s26 = scalar_select %p23, %s25, %s16
    %p27 = scmp.ge.s32.totalorder %s26, 2
    %s28 = scalar_select %p27, 0, %s26
    %s29 = ssub.s32 %s16, %s28
    %p30 = scmp.eq.s32.totalorder %s29, 0
    %s32 = sadd.s32 %s31, 1
    %s33 = scalar_select %p30, %s31, %s32
    %p36 = pneg %p30
    %p37 = scmp.eq.s32.totalorder %s9, 1
    %p38 = por %p36, %p37
    %p39 = scmp.ne.s32.totalorder %s31, %s34
    %p40 = scmp.eq.s32.totalorder %s9, 0
    %p41 = por %p39, %p40
    %p42 = scmp.ne.s32.totalorder %s31, %s34
    %p43 = scmp.eq.s32.totalorder %s14, 1
    %p44 = por %p42, %p43
    %p45 = scmp.ne.s32.totalorder %s34, %s35
    %p46 = scmp.eq.s32.totalorder %s14, 0
    %p47 = por %p45, %p46
    %p48 = scmp.ne.s32.totalorder %s34, %s35
    %p49 = scmp.eq.s32.totalorder %s15, 1
    %p50 = por %p48, %p49
    %p52 = scmp.ne.s32.totalorder %s35, %s51
    %p53 = scmp.eq.s32.totalorder %s15, 0
    %p54 = por %p52, %p53
    %s56 = sadd.s32 %s55, 1
    %p59 = scmp.eq.s32.totalorder %s9, 1
    %p60 = scmp.ne.s32.totalorder %s55, %s57
    %p61 = scmp.eq.s32.totalorder %s9, 0
    %p62 = por %p60, %p61
    %p63 = scmp.ne.s32.totalorder %s55, %s57
    %p64 = scmp.eq.s32.totalorder %s14, 1
    %p65 = por %p63, %p64
    %p66 = scmp.ne.s32.totalorder %s57, %s58
    %p67 = scmp.eq.s32.totalorder %s14, 0
    %p68 = por %p66, %p67
    %p69 = scmp.ne.s32.totalorder %s57, %s58
    %p70 = scmp.eq.s32.totalorder %s15, 1
    %p71 = por %p69, %p70
    %p73 = scmp.ne.s32.totalorder %s58, %s72
    %p74 = scmp.eq.s32.totalorder %s15, 0
    %p75 = por %p73, %p74
    %s77 = sadd.s32 %s76, 1
    %p80 = scmp.eq.s32.totalorder %s9, 1
    %p81 = scmp.ne.s32.totalorder %s76, %s78
    %p82 = scmp.eq.s32.totalorder %s9, 0
    %p83 = por %p81, %p82
    %p84 = scmp.ne.s32.totalorder %s76, %s78
    %p85 = scmp.eq.s32.totalorder %s14, 1
    %p86 = por %p84, %p85
    %p87 = scmp.ne.s32.totalorder %s78, %s79
    %p88 = scmp.eq.s32.totalorder %s14, 0
    %p89 = por %p87, %p88
    %p90 = scmp.ne.s32.totalorder %s78, %s79
    %p91 = scmp.eq.s32.totalorder %s15, 1
    %p92 = por %p90, %p91
    %p94 = scmp.ne.s32.totalorder %s79, %s93
    %p95 = scmp.eq.s32.totalorder %s15, 0
    %p96 = por %p94, %p95
    %s97 = ssub.s32 %s16, %s28
    %s98 = ssub.s32 %s17, %s24
    %s99 = sor.u32 %s97, %s98
    %p100 = scmp.eq.s32.totalorder %s99, 0
    %s102 = sadd.s32 %s101, 1
    %s103 = scalar_select %p100, %s101, %s102
    %p106 = pneg %p100
    %p107 = scmp.eq.s32.totalorder %s9, 1
    %p108 = por %p106, %p107
    %p109 = scmp.ne.s32.totalorder %s101, %s104
    %p110 = scmp.eq.s32.totalorder %s9, 0
    %p111 = por %p109, %p110
    %p112 = scmp.ne.s32.totalorder %s101, %s104
    %p113 = scmp.eq.s32.totalorder %s14, 1
    %p114 = por %p112, %p113
    %p115 = scmp.ne.s32.totalorder %s104, %s105
    %p116 = scmp.eq.s32.totalorder %s14, 0
    %p117 = por %p115, %p116
    %p118 = scmp.ne.s32.totalorder %s104, %s105
    %p119 = scmp.eq.s32.totalorder %s15, 1
    %p120 = por %p118, %p119
    %p122 = scmp.ne.s32.totalorder %s105, %s121
    %p123 = scmp.eq.s32.totalorder %s15, 0
    %p124 = por %p122, %p123
    %p125 = scmp.le.s32.totalorder 1, %s9
    %p126 = scmp.lt.s32.totalorder %s9, 3
    %p127 = pnand %p125, %p126
    %p128 = pneg %p127
    // Predicated region
    $region9: #{conv2dt_forward.1} parent=5 // pred_check
      _
    $region10: #{conv2dt_forward.1} parent=5 // pred_check_branch
      %130 = sbr.rel (%p127) target = $region12
    $region11: #{conv2dt_forward.1} parent=5 // pred_region
      %s131 = ssub.s32 %s9, 1
      // Predicated region
      $region13: #{conv2dt_forward.1} parent=11 // pred_check
        %p132 = pneg %p68
      $region14: #{conv2dt_forward.1} parent=11 // pred_check_branch
        %134 = sbr.rel (%p132) target = $region16
      $region15: #{conv2dt_forward.1} parent=11 // pred_region
        _
      $region16: #{conv2dt_forward.1} parent=11 // pred_fallthru
        _
      // Predicated region
      $region17: #{conv2dt_forward.1} parent=11 // pred_check
        %p135 = pneg %p89
      $region18: #{conv2dt_forward.1} parent=11 // pred_check_branch
        %137 = sbr.rel (%p135) target = $region20
      $region19: #{conv2dt_forward.1} parent=11 // pred_region
        _
      $region20: #{conv2dt_forward.1} parent=11 // pred_fallthru
        _
    $region12: #{conv2dt_forward.1} parent=5 // pred_fallthru
      _
    %p138 = scmp.lt.s32.totalorder %s9, 2
    // Predicated region
    $region21: #{conv2dt_forward.1} parent=5 // pred_check
      %p139 = pneg %p138
    $region22: #{conv2dt_forward.1} parent=5 // pred_check_branch
      %141 = sbr.rel (%p139) target = $region24
    $region23: #{conv2dt_forward.1} parent=5 // pred_region
      // Predicated region
      $region25: #{conv2dt_forward.1} parent=23 // pred_check
        %p142 = pneg %p41
      $region26: #{conv2dt_forward.1} parent=23 // pred_check_branch
        %144 = sbr.rel (%p142) target = $region28
      $region27: #{conv2dt_forward.1} parent=23 // pred_region
        %p145 = scmp.lt.s32.totalorder %s16, 1
        %s146 = scalar_select %p145, %s16, 1
        %s147 = smul.addr %s146, 4
        %s148 = smul.addr %s147, 4
        %s149 = scalar_lea.vmem %s0, %s148
      $region28: #{conv2dt_forward.1} parent=23 // pred_fallthru
        _
    $region24: #{conv2dt_forward.1} parent=5 // pred_fallthru
      _
    %p150 = scmp.le.s32.totalorder 1, %s9
    %p151 = scmp.lt.s32.totalorder %s9, 3
    %p152 = pnand %p150, %p151
    %p153 = pneg %p152
    // Predicated region
    $region29: #{conv2dt_forward.1} parent=5 // pred_check
      _
    $region30: #{conv2dt_forward.1} parent=5 // pred_check_branch
      %155 = sbr.rel (%p152) target = $region32
    $region31: #{conv2dt_forward.1} parent=5 // pred_region
      %s156 = ssub.s32 %s9, 1
      %p157 = scmp.lt.s32.totalorder %s18, 1
      %s158 = scalar_select %p157, %s18, 1
      %s159 = smul.addr %s158, 4
      %s160 = smul.addr %s159, 4
      %s161 = scalar_lea.vmem %s0, %s160
      %p162 = pneg %p47
      %p163 = pneg %p44
      %p164 = pneg %p68
      %p165 = pneg %p65
      %p166 = pneg %p89
      %p167 = pneg %p86
      %p168 = pneg %p117
      %p169 = pneg %p114
      %s170 = smul.u32 3, %s19
      %p171 = scmp.lt.s32.totalorder %s18, 1
      %s172 = scalar_select %p171, %s18, 1
      %p173 = scmp.lt.s32.totalorder %s170, 2
      %s174 = scalar_select %p173, %s170, 2
      %s175 = smul.addr %s172, 3
      %s176 = sadd.s32 %s174, %s175
      %s177 = smul.addr %s176, 8
      %s178 = scalar_lea.vmem %s3, %s177
      %p179 = scmp.lt.s32.totalorder %s18, 1
      %s180 = scalar_select %p179, %s18, 1
      %s181 = smul.addr %s180, 4
      %s182 = smul.addr %s181, 4
      %s183 = scalar_lea.vmem %s0, %s182
      %s184 = smul.u32 3, %s19
      %p185 = scmp.lt.s32.totalorder %s18, 1
      %s186 = scalar_select %p185, %s18, 1
      %p187 = scmp.lt.s32.totalorder %s184, 2
      %s188 = scalar_select %p187, %s184, 2
      %s189 = smul.addr %s186, 3
      %s190 = sadd.s32 %s188, %s189
      %s191 = smul.addr %s190, 8
      %s192 = scalar_lea.vmem %s3, %s191
      %s193 = smul.u32 3, %s19
      %s195 = smul.u32 %s19, 384
      %s196 = sshra.s32 %s195, 7
      %s197 = sand.u32 %s195, 127
      %s198 = smul.addr %s196, 4
      %s199 = scalar_lea.vmem %s183, %s198
      %v200 = vld [vmem:[%s199] sm:$0xff]
      %v201 = vld [vmem:[%s199 + $0x8] sm:$0xff]
      %v202 = vld [vmem:[%s2] sm:$0xff]
      %v203 = vld [vmem:[%s1] sm:$0xf]
      %s204 = scalar_lea.vmem %s1, 4
      %v205 = vld [vmem:[%s204] sm:$0xf]
      %v208 = vunpack.c.l.b16 %v200
      %v209 = vunpack.c.h.b16 %v200
      %v210 = vunpack.c.l.b16 %v201
      %v211 = vunpack.c.h.b16 %v201
      %v212 = vpack.c.b16 %v208, %v208
      %v213 = vpack.c.b16 %v209, %v209
      %v214 = vpack.c.b16 %v210, %v210
      %v215 = vpack.c.b16 %v211, %v211
      %216 = vrot.lane.b32.xlu0 %v212, 127
      %v217 = vpop.permute.xlu0 %216
      %218 = vrot.lane.b32.xlu0 %v213, 127
      %v219 = vpop.permute.xlu0 %218
      %220 = vrot.lane.b32.xlu0 %v214, 127
      %v221 = vpop.permute.xlu0 %220
      %222 = vrot.lane.b32.xlu0 %v215, 127
      %v223 = vpop.permute.xlu0 %222
      %vm224 = vcmask 1039360
      %v225 = vsel %vm224, %v217, %v219
      %v226 = vsel %vm224, %v219, %v221
      %v227 = vsel %vm224, %v221, %v223
      %vm228 = vcmask 64512
      %v230 = vsel %vm228, %v205, 0
      %vm232 = vcmask 1043456
      %v234 = vsel %vm232, %v225, 0
      %v237 = vsel %vm232, %v226, 0
      %v240 = vsel %vm232, %v227, 0
      %242 = vmatprep.subr.bf16.mxu0 %v237
      %243 = vmatpush1.bf16.msra.mxu0 %v234
      %244 = vmatprep.subr.bf16.mxu0 0
      %245 = vmatpush1.bf16.msra.mxu0 0
      %246 = vmatprep.subr.bf16.mxu0 0
      %247 = vmatpush1.bf16.msra.mxu0 0
      %248 = vmatprep.subr.bf16.mxu0 0
      %249 = vmatpush1.bf16.msra.mxu0 0
      %250 = vmatprep.subr.bf16.mxu0 0
      %251 = vmatpush1.bf16.msra.mxu0 0
      %252 = vmatprep.subr.bf16.mxu0 0
      %253 = vmatpush1.bf16.msra.mxu0 0
      %254 = vmatprep.subr.bf16.mxu0 0
      %255 = vmatpush1.bf16.msra.mxu0 0
      %256 = vmatprep.subr.bf16.mxu0 0
      %257 = vmatpush1.bf16.msra.mxu0 0
      %258 = vmatprep.subr.bf16.mxu0 0
      %259 = vmatpush1.bf16.msra.mxu0 0
      %260 = vmatprep.subr.bf16.mxu0 0
      %261 = vmatpush1.bf16.msra.mxu0 0
      %262 = vmatprep.subr.bf16.mxu0 0
      %263 = vmatpush1.bf16.msra.mxu0 0
      %264 = vmatprep.subr.bf16.mxu0 0
      %265 = vmatpush1.bf16.msra.mxu0 0
      %266 = vmatprep.subr.bf16.mxu0 0
      %267 = vmatpush1.bf16.msra.mxu0 0
      %268 = vmatprep.subr.bf16.mxu0 0
      %269 = vmatpush1.bf16.msra.mxu0 0
      %270 = vmatprep.subr.bf16.mxu0 0
      %271 = vmatpush1.bf16.msra.mxu0 0
      %272 = vmatprep.subr.bf16.mxu0 0
      %273 = vmatpush1.bf16.msra.mxu0 0
      %274 = vmatprep.mubr.bf16.mxu0 0
      %275 = vmatmul.mubr.bf16.gmra.mrb[0].mxu0 %v230
      %v276 = vpop.f32.mrb[0].mxu0
      %v277 = vadd.f32 0.0, %v276
      %v278 = vpop.f32.mrb[0].mxu0
      %v279 = vadd.f32 0.0, %v278
      %v280 = vpop.f32.mrb[0].mxu0
      %v281 = vpop.f32.mrb[0].mxu0
      %282 = vdwg.mxu0
      %283 = vmatprep.subr.bf16.mxu0 0
      %284 = vmatpush1.bf16.msra.mxu0 %v240
      %285 = vmatprep.subr.bf16.mxu0 0
      %286 = vmatpush1.bf16.msra.mxu0 0
      %287 = vmatprep.subr.bf16.mxu0 0
      %288 = vmatpush1.bf16.msra.mxu0 0
      %289 = vmatprep.subr.bf16.mxu0 0
      %290 = vmatpush1.bf16.msra.mxu0 0
      %291 = vmatprep.subr.bf16.mxu0 0
      %292 = vmatpush1.bf16.msra.mxu0 0
      %293 = vmatprep.subr.bf16.mxu0 0
      %294 = vmatpush1.bf16.msra.mxu0 0
      %295 = vmatprep.subr.bf16.mxu0 0
      %296 = vmatpush1.bf16.msra.mxu0 0
      %297 = vmatprep.subr.bf16.mxu0 0
      %298 = vmatpush1.bf16.msra.mxu0 0
      %299 = vmatprep.subr.bf16.mxu0 0
      %300 = vmatpush1.bf16.msra.mxu0 0
      %301 = vmatprep.subr.bf16.mxu0 0
      %302 = vmatpush1.bf16.msra.mxu0 0
      %303 = vmatprep.subr.bf16.mxu0 0
      %304 = vmatpush1.bf16.msra.mxu0 0
      %305 = vmatprep.subr.bf16.mxu0 0
      %306 = vmatpush1.bf16.msra.mxu0 0
      %307 = vmatprep.subr.bf16.mxu0 0
      %308 = vmatpush1.bf16.msra.mxu0 0
      %309 = vmatprep.subr.bf16.mxu0 0
      %310 = vmatpush1.bf16.msra.mxu0 0
      %311 = vmatprep.subr.bf16.mxu0 0
      %312 = vmatpush1.bf16.msra.mxu0 0
      %313 = vmatprep.subr.bf16.mxu0 0
      %314 = vmatpush1.bf16.msra.mxu0 0
      %315 = vmatprep.mubr.bf16.mxu0 0
      %316 = vmatmul.mubr.bf16.gmra.mrb[0].mxu0 %v230
      %v317 = vpop.f32.mrb[0].mxu0
      %v318 = vadd.f32 0.0, %v317
      %v319 = vpop.f32.mrb[0].mxu0
      %v320 = vpop.f32.mrb[0].mxu0
      %v321 = vpop.f32.mrb[0].mxu0
      %322 = vdwg.mxu0
      %v324 = vsel %vm228, %v203, 0
      %v327 = vsel %vm232, %v212, 0
      %v330 = vsel %vm232, %v213, 0
      %v333 = vsel %vm232, %v214, 0
      %335 = vmatprep.subr.bf16.mxu0 %v330
      %336 = vmatpush1.bf16.msra.mxu0 %v327
      %337 = vmatprep.subr.bf16.mxu0 0
      %338 = vmatpush1.bf16.msra.mxu0 0
      %339 = vmatprep.subr.bf16.mxu0 0
      %340 = vmatpush1.bf16.msra.mxu0 0
      %341 = vmatprep.subr.bf16.mxu0 0
      %342 = vmatpush1.bf16.msra.mxu0 0
      %343 = vmatprep.subr.bf16.mxu0 0
      %344 = vmatpush1.bf16.msra.mxu0 0
      %345 = vmatprep.subr.bf16.mxu0 0
      %346 = vmatpush1.bf16.msra.mxu0 0
      %347 = vmatprep.subr.bf16.mxu0 0
      %348 = vmatpush1.bf16.msra.mxu0 0
      %349 = vmatprep.subr.bf16.mxu0 0
      %350 = vmatpush1.bf16.msra.mxu0 0
      %351 = vmatprep.subr.bf16.mxu0 0
      %352 = vmatpush1.bf16.msra.mxu0 0
      %353 = vmatprep.subr.bf16.mxu0 0
      %354 = vmatpush1.bf16.msra.mxu0 0
      %355 = vmatprep.subr.bf16.mxu0 0
      %356 = vmatpush1.bf16.msra.mxu0 0
      %357 = vmatprep.subr.bf16.mxu0 0
      %358 = vmatpush1.bf16.msra.mxu0 0
      %359 = vmatprep.subr.bf16.mxu0 0
      %360 = vmatpush1.bf16.msra.mxu0 0
      %361 = vmatprep.subr.bf16.mxu0 0
      %362 = vmatpush1.bf16.msra.mxu0 0
      %363 = vmatprep.subr.bf16.mxu0 0
      %364 = vmatpush1.bf16.msra.mxu0 0
      %365 = vmatprep.subr.bf16.mxu0 0
      %366 = vmatpush1.bf16.msra.mxu0 0
      %367 = vmatprep.mubr.bf16.mxu0 0
      %368 = vmatmul.mubr.bf16.gmra.mrb[0].mxu0 %v324
      %v369 = vpop.f32.mrb[0].mxu0
      %v370 = vadd.f32 %v277, %v369
      %v371 = vpop.f32.mrb[0].mxu0
      %v372 = vadd.f32 %v279, %v371
      %v373 = vpop.f32.mrb[0].mxu0
      %v374 = vpop.f32.mrb[0].mxu0
      %375 = vdwg.mxu0
      %376 = vmatprep.subr.bf16.mxu0 0
      %377 = vmatpush1.bf16.msra.mxu0 %v333
      %378 = vmatprep.subr.bf16.mxu0 0
      %379 = vmatpush1.bf16.msra.mxu0 0
      %380 = vmatprep.subr.bf16.mxu0 0
      %381 = vmatpush1.bf16.msra.mxu0 0
      %382 = vmatprep.subr.bf16.mxu0 0
      %383 = vmatpush1.bf16.msra.mxu0 0
      %384 = vmatprep.subr.bf16.mxu0 0
      %385 = vmatpush1.bf16.msra.mxu0 0
      %386 = vmatprep.subr.bf16.mxu0 0
      %387 = vmatpush1.bf16.msra.mxu0 0
      %388 = vmatprep.subr.bf16.mxu0 0
      %389 = vmatpush1.bf16.msra.mxu0 0
      %390 = vmatprep.subr.bf16.mxu0 0
      %391 = vmatpush1.bf16.msra.mxu0 0
      %392 = vmatprep.subr.bf16.mxu0 0
      %393 = vmatpush1.bf16.msra.mxu0 0
      %394 = vmatprep.subr.bf16.mxu0 0
      %395 = vmatpush1.bf16.msra.mxu0 0
      %396 = vmatprep.subr.bf16.mxu0 0
      %397 = vmatpush1.bf16.msra.mxu0 0
      %398 = vmatprep.subr.bf16.mxu0 0
      %399 = vmatpush1.bf16.msra.mxu0 0
      %400 = vmatprep.subr.bf16.mxu0 0
      %401 = vmatpush1.bf16.msra.mxu0 0
      %402 = vmatprep.subr.bf16.mxu0 0
      %403 = vmatpush1.bf16.msra.mxu0 0
      %404 = vmatprep.subr.bf16.mxu0 0
      %405 = vmatpush1.bf16.msra.mxu0 0
      %406 = vmatprep.subr.bf16.mxu0 0
      %407 = vmatpush1.bf16.msra.mxu0 0
      %408 = vmatprep.mubr.bf16.mxu0 0
      %409 = vmatmul.mubr.bf16.gmra.mrb[0].mxu0 %v324
      %v410 = vpop.f32.mrb[0].mxu0
      %v411 = vadd.f32 %v318, %v410
      %v412 = vpop.f32.mrb[0].mxu0
      %v413 = vpop.f32.mrb[0].mxu0
      %v414 = vpop.f32.mrb[0].mxu0
      %415 = vdwg.mxu0
      %s416 = scalar_lea.vmem %s1, 8
      %v417 = vld [vmem:[%s416] sm:$0xf]
      %418 = vrot.lane.b32.xlu0 %v212, 126
      %v419 = vpop.permute.xlu0 %418
      %420 = vrot.lane.b32.xlu0 %v213, 126
      %v421 = vpop.permute.xlu0 %420
      %422 = vrot.lane.b32.xlu0 %v214, 126
      %v423 = vpop.permute.xlu0 %422
      %424 = vrot.lane.b32.xlu0 %v215, 126
      %v425 = vpop.permute.xlu0 %424
      %vm426 = vcmask 1031168
      %v427 = vsel %vm426, %v419, %v421
      %v428 = vsel %vm426, %v421, %v423
      %v429 = vsel %vm426, %v423, %v425
      %v431 = vsel %vm228, %v417, 0
      %v434 = vsel %vm232, %v427, 0
      %v437 = vsel %vm232, %v428, 0
      %v440 = vsel %vm232, %v429, 0
      %442 = vmatprep.subr.bf16.mxu0 %v437
      %443 = vmatpush1.bf16.msra.mxu0 %v434
      %444 = vmatprep.subr.bf16.mxu0 0
      %445 = vmatpush1.bf16.msra.mxu0 0
      %446 = vmatprep.subr.bf16.mxu0 0
      %447 = vmatpush1.bf16.msra.mxu0 0
      %448 = vmatprep.subr.bf16.mxu0 0
      %449 = vmatpush1.bf16.msra.mxu0 0
      %450 = vmatprep.subr.bf16.mxu0 0
      %451 = vmatpush1.bf16.msra.mxu0 0
      %452 = vmatprep.subr.bf16.mxu0 0
      %453 = vmatpush1.bf16.msra.mxu0 0
      %454 = vmatprep.subr.bf16.mxu0 0
      %455 = vmatpush1.bf16.msra.mxu0 0
      %456 = vmatprep.subr.bf16.mxu0 0
      %457 = vmatpush1.bf16.msra.mxu0 0
      %458 = vmatprep.subr.bf16.mxu0 0
      %459 = vmatpush1.bf16.msra.mxu0 0
      %460 = vmatprep.subr.bf16.mxu0 0
      %461 = vmatpush1.bf16.msra.mxu0 0
      %462 = vmatprep.subr.bf16.mxu0 0
      %463 = vmatpush1.bf16.msra.mxu0 0
      %464 = vmatprep.subr.bf16.mxu0 0
      %465 = vmatpush1.bf16.msra.mxu0 0
      %466 = vmatprep.subr.bf16.mxu0 0
      %467 = vmatpush1.bf16.msra.mxu0 0
      %468 = vmatprep.subr.bf16.mxu0 0
      %469 = vmatpush1.bf16.msra.mxu0 0
      %470 = vmatprep.subr.bf16.mxu0 0
      %471 = vmatpush1.bf16.msra.mxu0 0
      %472 = vmatprep.subr.bf16.mxu0 0
      %473 = vmatpush1.bf16.msra.mxu0 0
      %474 = vmatprep.mubr.bf16.mxu0 0
      %475 = vmatmul.mubr.bf16.gmra.mrb[0].mxu0 %v431
      %v476 = vpop.f32.mrb[0].mxu0
      %v477 = vadd.f32 0.0, %v476
      %v478 = vpop.f32.mrb[0].mxu0
      %v479 = vadd.f32 0.0, %v478
      %v480 = vpop.f32.mrb[0].mxu0
      %v481 = vpop.f32.mrb[0].mxu0
      %482 = vdwg.mxu0
      %483 = vmatprep.subr.bf16.mxu0 0
      %484 = vmatpush1.bf16.msra.mxu0 %v440
      %485 = vmatprep.subr.bf16.mxu0 0
      %486 = vmatpush1.bf16.msra.mxu0 0
      %487 = vmatprep.subr.bf16.mxu0 0
      %488 = vmatpush1.bf16.msra.mxu0 0
      %489 = vmatprep.subr.bf16.mxu0 0
      %490 = vmatpush1.bf16.msra.mxu0 0
      %491 = vmatprep.subr.bf16.mxu0 0
      %492 = vmatpush1.bf16.msra.mxu0 0
      %493 = vmatprep.subr.bf16.mxu0 0
      %494 = vmatpush1.bf16.msra.mxu0 0
      %495 = vmatprep.subr.bf16.mxu0 0
      %496 = vmatpush1.bf16.msra.mxu0 0
      %497 = vmatprep.subr.bf16.mxu0 0
      %498 = vmatpush1.bf16.msra.mxu0 0
      %499 = vmatprep.subr.bf16.mxu0 0
      %500 = vmatpush1.bf16.msra.mxu0 0
      %501 = vmatprep.subr.bf16.mxu0 0
      %502 = vmatpush1.bf16.msra.mxu0 0
      %503 = vmatprep.subr.bf16.mxu0 0
      %504 = vmatpush1.bf16.msra.mxu0 0
      %505 = vmatprep.subr.bf16.mxu0 0
      %506 = vmatpush1.bf16.msra.mxu0 0
      %507 = vmatprep.subr.bf16.mxu0 0
      %508 = vmatpush1.bf16.msra.mxu0 0
      %509 = vmatprep.subr.bf16.mxu0 0
      %510 = vmatpush1.bf16.msra.mxu0 0
      %511 = vmatprep.subr.bf16.mxu0 0
      %512 = vmatpush1.bf16.msra.mxu0 0
      %513 = vmatprep.subr.bf16.mxu0 0
      %514 = vmatpush1.bf16.msra.mxu0 0
      %515 = vmatprep.mubr.bf16.mxu0 0
      %516 = vmatmul.mubr.bf16.gmra.mrb[0].mxu0 %v431
      %v517 = vpop.f32.mrb[0].mxu0
      %v518 = vadd.f32 0.0, %v517
      %v519 = vpop.f32.mrb[0].mxu0
      %v520 = vpop.f32.mrb[0].mxu0
      %v521 = vpop.f32.mrb[0].mxu0
      %522 = vdwg.mxu0
      %v523 = vadd.f32 %v370, %v477
      %v524 = vadd.f32 %v372, %v479
      %v525 = vadd.f32 %v411, %v518
      %s526 = scalar_lea.vmem %s1, 12
      %v527 = vld [vmem:[%s526] sm:$0xf]
      %528 = vrot.lane.b32.xlu0 %v212, 109
      %v529 = vpop.permute.xlu0 %528
      %530 = vrot.lane.b32.xlu0 %v213, 109
      %v531 = vpop.permute.xlu0 %530
      %532 = vrot.lane.b32.xlu0 %v214, 109
      %v533 = vpop.permute.xlu0 %532
      %534 = vrot.lane.b32.xlu0 %v215, 109
      %v535 = vpop.permute.xlu0 %534
      %vm536 = vcmask 891904
      %v537 = vsel %vm536, %v529, %v531
      %v538 = vsel %vm536, %v531, %v533
      %v539 = vsel %vm536, %v533, %v535
      %v541 = vsel %vm228, %v527, 0
      %v544 = vsel %vm232, %v537, 0
      %v547 = vsel %vm232, %v538, 0
      %v550 = vsel %vm232, %v539, 0
      %552 = vmatprep.subr.bf16.mxu0 %v547
      %553 = vmatpush1.bf16.msra.mxu0 %v544
      %554 = vmatprep.subr.bf16.mxu0 0
      %555 = vmatpush1.bf16.msra.mxu0 0
      %556 = vmatprep.subr.bf16.mxu0 0
      %557 = vmatpush1.bf16.msra.mxu0 0
      %558 = vmatprep.subr.bf16.mxu0 0
      %559 = vmatpush1.bf16.msra.mxu0 0
      %560 = vmatprep.subr.bf16.mxu0 0
      %561 = vmatpush1.bf16.msra.mxu0 0
      %562 = vmatprep.subr.bf16.mxu0 0
      %563 = vmatpush1.bf16.msra.mxu0 0
      %564 = vmatprep.subr.bf16.mxu0 0
      %565 = vmatpush1.bf16.msra.mxu0 0
      %566 = vmatprep.subr.bf16.mxu0 0
      %567 = vmatpush1.bf16.msra.mxu0 0
      %568 = vmatprep.subr.bf16.mxu0 0
      %569 = vmatpush1.bf16.msra.mxu0 0
      %570 = vmatprep.subr.bf16.mxu0 0
      %571 = vmatpush1.bf16.msra.mxu0 0
      %572 = vmatprep.subr.bf16.mxu0 0
      %573 = vmatpush1.bf16.msra.mxu0 0
      %574 = vmatprep.subr.bf16.mxu0 0
      %575 = vmatpush1.bf16.msra.mxu0 0
      %576 = vmatprep.subr.bf16.mxu0 0
      %577 = vmatpush1.bf16.msra.mxu0 0
      %578 = vmatprep.subr.bf16.mxu0 0
      %579 = vmatpush1.bf16.msra.mxu0 0
      %580 = vmatprep.subr.bf16.mxu0 0
      %581 = vmatpush1.bf16.msra.mxu0 0
      %582 = vmatprep.subr.bf16.mxu0 0
      %583 = vmatpush1.bf16.msra.mxu0 0
      %584 = vmatprep.mubr.bf16.mxu0 0
      %585 = vmatmul.mubr.bf16.gmra.mrb[0].mxu0 %v541
      %v586 = vpop.f32.mrb[0].mxu0
      %v587 = vadd.f32 0.0, %v586
      %v588 = vpop.f32.mrb[0].mxu0
      %v589 = vadd.f32 0.0, %v588
      %v590 = vpop.f32.mrb[0].mxu0
      %v591 = vpop.f32.mrb[0].mxu0
      %592 = vdwg.mxu0
      %593 = vmatprep.subr.bf16.mxu0 0
      %594 = vmatpush1.bf16.msra.mxu0 %v550
      %595 = vmatprep.subr.bf16.mxu0 0
      %596 = vmatpush1.bf16.msra.mxu0 0
      %597 = vmatprep.subr.bf16.mxu0 0
      %598 = vmatpush1.bf16.msra.mxu0 0
      %599 = vmatprep.subr.bf16.mxu0 0
      %600 = vmatpush1.bf16.msra.mxu0 0
      %601 = vmatprep.subr.bf16.mxu0 0
      %602 = vmatpush1.bf16.msra.mxu0 0
      %603 = vmatprep.subr.bf16.mxu0 0
      %604 = vmatpush1.bf16.msra.mxu0 0
      %605 = vmatprep.subr.bf16.mxu0 0
      %606 = vmatpush1.bf16.msra.mxu0 0
      %607 = vmatprep.subr.bf16.mxu0 0
      %608 = vmatpush1.bf16.msra.mxu0 0
      %609 = vmatprep.subr.bf16.mxu0 0
      %610 = vmatpush1.bf16.msra.mxu0 0
      %611 = vmatprep.subr.bf16.mxu0 0
      %612 = vmatpush1.bf16.msra.mxu0 0
      %613 = vmatprep.subr.bf16.mxu0 0
      %614 = vmatpush1.bf16.msra.mxu0 0
      %615 = vmatprep.subr.bf16.mxu0 0
      %616 = vmatpush1.bf16.msra.mxu0 0
      %617 = vmatprep.subr.bf16.mxu0 0
      %618 = vmatpush1.bf16.msra.mxu0 0
      %619 = vmatprep.subr.bf16.mxu0 0
      %620 = vmatpush1.bf16.msra.mxu0 0
      %621 = vmatprep.subr.bf16.mxu0 0
      %622 = vmatpush1.bf16.msra.mxu0 0
      %623 = vmatprep.subr.bf16.mxu0 0
      %624 = vmatpush1.bf16.msra.mxu0 0
      %625 = vmatprep.mubr.bf16.mxu0 0
      %626 = vmatmul.mubr.bf16.gmra.mrb[0].mxu0 %v541
      %v627 = vpop.f32.mrb[0].mxu0
      %v628 = vadd.f32 0.0, %v627
      %v629 = vpop.f32.mrb[0].mxu0
      %v630 = vpop.f32.mrb[0].mxu0
      %v631 = vpop.f32.mrb[0].mxu0
      %632 = vdwg.mxu0
      %v633 = vadd.f32 %v523, %v587
      %v634 = vadd.f32 %v524, %v589
      %v635 = vadd.f32 %v525, %v628
      %s636 = scalar_lea.vmem %s1, 16
      %v637 = vld [vmem:[%s636] sm:$0xf]
      %638 = vrot.lane.b32.xlu0 %v212, 108
      %v639 = vpop.permute.xlu0 %638
      %640 = vrot.lane.b32.xlu0 %v213, 108
      %v641 = vpop.permute.xlu0 %640
      %642 = vrot.lane.b32.xlu0 %v214, 108
      %v643 = vpop.permute.xlu0 %642
      %644 = vrot.lane.b32.xlu0 %v215, 108
      %v645 = vpop.permute.xlu0 %644
      %vm646 = vcmask 883712
      %v647 = vsel %vm646, %v639, %v641
      %v648 = vsel %vm646, %v641, %v643
      %v649 = vsel %vm646, %v643, %v645
      %v651 = vsel %vm228, %v637, 0
      %v654 = vsel %vm232, %v647, 0
      %v657 = vsel %vm232, %v648, 0
      %v660 = vsel %vm232, %v649, 0
      %662 = vmatprep.subr.bf16.mxu0 %v657
      %663 = vmatpush1.bf16.msra.mxu0 %v654
      %664 = vmatprep.subr.bf16.mxu0 0
      %665 = vmatpush1.bf16.msra.mxu0 0
      %666 = vmatprep.subr.bf16.mxu0 0
      %667 = vmatpush1.bf16.msra.mxu0 0
      %668 = vmatprep.subr.bf16.mxu0 0
      %669 = vmatpush1.bf16.msra.mxu0 0
      %670 = vmatprep.subr.bf16.mxu0 0
      %671 = vmatpush1.bf16.msra.mxu0 0
      %672 = vmatprep.subr.bf16.mxu0 0
      %673 = vmatpush1.bf16.msra.mxu0 0
      %674 = vmatprep.subr.bf16.mxu0 0
      %675 = vmatpush1.bf16.msra.mxu0 0
      %676 = vmatprep.subr.bf16.mxu0 0
      %677 = vmatpush1.bf16.msra.mxu0 0
      %678 = vmatprep.subr.bf16.mxu0 0
      %679 = vmatpush1.bf16.msra.mxu0 0
      %680 = vmatprep.subr.bf16.mxu0 0
      %681 = vmatpush1.bf16.msra.mxu0 0
      %682 = vmatprep.subr.bf16.mxu0 0
      %683 = vmatpush1.bf16.msra.mxu0 0
      %684 = vmatprep.subr.bf16.mxu0 0
      %685 = vmatpush1.bf16.msra.mxu0 0
      %686 = vmatprep.subr.bf16.mxu0 0
      %687 = vmatpush1.bf16.msra.mxu0 0
      %688 = vmatprep.subr.bf16.mxu0 0
      %689 = vmatpush1.bf16.msra.mxu0 0
      %690 = vmatprep.subr.bf16.mxu0 0
      %691 = vmatpush1.bf16.msra.mxu0 0
      %692 = vmatprep.subr.bf16.mxu0 0
      %693 = vmatpush1.bf16.msra.mxu0 0
      %694 = vmatprep.mubr.bf16.mxu0 0
      %695 = vmatmul.mubr.bf16.gmra.mrb[0].mxu0 %v651
      %v696 = vpop.f32.mrb[0].mxu0
      %v697 = vadd.f32 0.0, %v696
      %v698 = vpop.f32.mrb[0].mxu0
      %v699 = vadd.f32 0.0, %v698
      %v700 = vpop.f32.mrb[0].mxu0
      %v701 = vpop.f32.mrb[0].mxu0
      %702 = vdwg.mxu0
      %703 = vmatprep.subr.bf16.mxu0 0
      %704 = vmatpush1.bf16.msra.mxu0 %v660
      %705 = vmatprep.subr.bf16.mxu0 0
      %706 = vmatpush1.bf16.msra.mxu0 0
      %707 = vmatprep.subr.bf16.mxu0 0
      %708 = vmatpush1.bf16.msra.mxu0 0
      %709 = vmatprep.subr.bf16.mxu0 0
      %710 = vmatpush1.bf16.msra.mxu0 0
      %711 = vmatprep.subr.bf16.mxu0 0
      %712 = vmatpush1.bf16.msra.mxu0 0
      %713 = vmatprep.subr.bf16.mxu0 0
      %714 = vmatpush1.bf16.msra.mxu0 0
      %715 = vmatprep.subr.bf16.mxu0 0
      %716 = vmatpush1.bf16.msra.mxu0 0
      %717 = vmatprep.subr.bf16.mxu0 0
      %718 = vmatpush1.bf16.msra.mxu0 0
      %719 = vmatprep.subr.bf16.mxu0 0
      %720 = vmatpush1.bf16.msra.mxu0 0
      %721 = vmatprep.subr.bf16.mxu0 0
      %722 = vmatpush1.bf16.msra.mxu0 0
      %723 = vmatprep.subr.bf16.mxu0 0
      %724 = vmatpush1.bf16.msra.mxu0 0
      %725 = vmatprep.subr.bf16.mxu0 0
      %726 = vmatpush1.bf16.msra.mxu0 0
      %727 = vmatprep.subr.bf16.mxu0 0
      %728 = vmatpush1.bf16.msra.mxu0 0
      %729 = vmatprep.subr.bf16.mxu0 0
      %730 = vmatpush1.bf16.msra.mxu0 0
      %731 = vmatprep.subr.bf16.mxu0 0
      %732 = vmatpush1.bf16.msra.mxu0 0
      %733 = vmatprep.subr.bf16.mxu0 0
      %734 = vmatpush1.bf16.msra.mxu0 0
      %735 = vmatprep.mubr.bf16.mxu0 0
      %736 = vmatmul.mubr.bf16.gmra.mrb[0].mxu0 %v651
      %v737 = vpop.f32.mrb[0].mxu0
      %v738 = vadd.f32 0.0, %v737
      %v739 = vpop.f32.mrb[0].mxu0
      %v740 = vpop.f32.mrb[0].mxu0
      %v741 = vpop.f32.mrb[0].mxu0
      %742 = vdwg.mxu0
      %v743 = vadd.f32 %v633, %v697
      %v744 = vadd.f32 %v634, %v699
      %v745 = vadd.f32 %v635, %v738
      %s746 = scalar_lea.vmem %s1, 20
      %v747 = vld [vmem:[%s746] sm:$0xf]
      %748 = vrot.lane.b32.xlu0 %v212, 107
      %v749 = vpop.permute.xlu0 %748
      %750 = vrot.lane.b32.xlu0 %v213, 107
      %v751 = vpop.permute.xlu0 %750
      %752 = vrot.lane.b32.xlu0 %v214, 107
      %v753 = vpop.permute.xlu0 %752
      %754 = vrot.lane.b32.xlu0 %v215, 107
      %v755 = vpop.permute.xlu0 %754
      %vm756 = vcmask 875520
      %v757 = vsel %vm756, %v749, %v751
      %v758 = vsel %vm756, %v751, %v753
      %v759 = vsel %vm756, %v753, %v755
      %v761 = vsel %vm228, %v747, 0
      %v764 = vsel %vm232, %v757, 0
      %v767 = vsel %vm232, %v758, 0
      %v770 = vsel %vm232, %v759, 0
      %772 = vmatprep.subr.bf16.mxu0 %v767
      %773 = vmatpush1.bf16.msra.mxu0 %v764
      %774 = vmatprep.subr.bf16.mxu0 0
      %775 = vmatpush1.bf16.msra.mxu0 0
      %776 = vmatprep.subr.bf16.mxu0 0
      %777 = vmatpush1.bf16.msra.mxu0 0
      %778 = vmatprep.subr.bf16.mxu0 0
      %779 = vmatpush1.bf16.msra.mxu0 0
      %780 = vmatprep.subr.bf16.mxu0 0
      %781 = vmatpush1.bf16.msra.mxu0 0
      %782 = vmatprep.subr.bf16.mxu0 0
      %783 = vmatpush1.bf16.msra.mxu0 0
      %784 = vmatprep.subr.bf16.mxu0 0
      %785 = vmatpush1.bf16.msra.mxu0 0
      %786 = vmatprep.subr.bf16.mxu0 0
      %787 = vmatpush1.bf16.msra.mxu0 0
      %788 = vmatprep.subr.bf16.mxu0 0
      %789 = vmatpush1.bf16.msra.mxu0 0
      %790 = vmatprep.subr.bf16.mxu0 0
      %791 = vmatpush1.bf16.msra.mxu0 0
      %792 = vmatprep.subr.bf16.mxu0 0
      %793 = vmatpush1.bf16.msra.mxu0 0
      %794 = vmatprep.subr.bf16.mxu0 0
      %795 = vmatpush1.bf16.msra.mxu0 0
      %796 = vmatprep.subr.bf16.mxu0 0
      %797 = vmatpush1.bf16.msra.mxu0 0
      %798 = vmatprep.subr.bf16.mxu0 0
      %799 = vmatpush1.bf16.msra.mxu0 0
      %800 = vmatprep.subr.bf16.mxu0 0
      %801 = vmatpush1.bf16.msra.mxu0 0
      %802 = vmatprep.subr.bf16.mxu0 0
      %803 = vmatpush1.bf16.msra.mxu0 0
      %804 = vmatprep.mubr.bf16.mxu0 0
      %805 = vmatmul.mubr.bf16.gmra.mrb[0].mxu0 %v761
      %v806 = vpop.f32.mrb[0].mxu0
      %v807 = vadd.f32 0.0, %v806
      %v808 = vpop.f32.mrb[0].mxu0
      %v809 = vadd.f32 0.0, %v808
      %v810 = vpop.f32.mrb[0].mxu0
      %v811 = vpop.f32.mrb[0].mxu0
      %812 = vdwg.mxu0
      %813 = vmatprep.subr.bf16.mxu0 0
      %814 = vmatpush1.bf16.msra.mxu0 %v770
      %815 = vmatprep.subr.bf16.mxu0 0
      %816 = vmatpush1.bf16.msra.mxu0 0
      %817 = vmatprep.subr.bf16.mxu0 0
      %818 = vmatpush1.bf16.msra.mxu0 0
      %819 = vmatprep.subr.bf16.mxu0 0
      %820 = vmatpush1.bf16.msra.mxu0 0
      %821 = vmatprep.subr.bf16.mxu0 0
      %822 = vmatpush1.bf16.msra.mxu0 0
      %823 = vmatprep.subr.bf16.mxu0 0
      %824 = vmatpush1.bf16.msra.mxu0 0
      %825 = vmatprep.subr.bf16.mxu0 0
      %826 = vmatpush1.bf16.msra.mxu0 0
      %827 = vmatprep.subr.bf16.mxu0 0
      %828 = vmatpush1.bf16.msra.mxu0 0
      %829 = vmatprep.subr.bf16.mxu0 0
      %830 = vmatpush1.bf16.msra.mxu0 0
      %831 = vmatprep.subr.bf16.mxu0 0
      %832 = vmatpush1.bf16.msra.mxu0 0
      %833 = vmatprep.subr.bf16.mxu0 0
      %834 = vmatpush1.bf16.msra.mxu0 0
      %835 = vmatprep.subr.bf16.mxu0 0
      %836 = vmatpush1.bf16.msra.mxu0 0
      %837 = vmatprep.subr.bf16.mxu0 0
      %838 = vmatpush1.bf16.msra.mxu0 0
      %839 = vmatprep.subr.bf16.mxu0 0
      %840 = vmatpush1.bf16.msra.mxu0 0
      %841 = vmatprep.subr.bf16.mxu0 0
      %842 = vmatpush1.bf16.msra.mxu0 0
      %843 = vmatprep.subr.bf16.mxu0 0
      %844 = vmatpush1.bf16.msra.mxu0 0
      %845 = vmatprep.mubr.bf16.mxu0 0
      %846 = vmatmul.mubr.bf16.gmra.mrb[0].mxu0 %v761
      %v847 = vpop.f32.mrb[0].mxu0
      %v848 = vadd.f32 0.0, %v847
      %v849 = vpop.f32.mrb[0].mxu0
      %v850 = vpop.f32.mrb[0].mxu0
      %v851 = vpop.f32.mrb[0].mxu0
      %852 = vdwg.mxu0
      %v853 = vadd.f32 %v743, %v807
      %v854 = vadd.f32 %v744, %v809
      %v855 = vadd.f32 %v745, %v848
      %s856 = scalar_lea.vmem %s1, 24
      %v857 = vld [vmem:[%s856] sm:$0xf]
      %858 = vrot.lane.b32.xlu0 %v212, 90
      %v859 = vpop.permute.xlu0 %858
      %860 = vrot.lane.b32.xlu0 %v213, 90
      %v861 = vpop.permute.xlu0 %860
      %862 = vrot.lane.b32.xlu0 %v214, 90
      %v863 = vpop.permute.xlu0 %862
      %864 = vrot.lane.b32.xlu0 %v215, 90
      %v865 = vpop.permute.xlu0 %864
      %vm866 = vcmask 736256
      %v867 = vsel %vm866, %v859, %v861
      %v868 = vsel %vm866, %v861, %v863
      %v869 = vsel %vm866, %v863, %v865
      %v871 = vsel %vm228, %v857, 0
      %v874 = vsel %vm232, %v867, 0
      %v877 = vsel %vm232, %v868, 0
      %v880 = vsel %vm232, %v869, 0
      %882 = vmatprep.subr.bf16.mxu0 %v877
      %883 = vmatpush1.bf16.msra.mxu0 %v874
      %884 = vmatprep.subr.bf16.mxu0 0
      %885 = vmatpush1.bf16.msra.mxu0 0
      %886 = vmatprep.subr.bf16.mxu0 0
      %887 = vmatpush1.bf16.msra.mxu0 0
      %888 = vmatprep.subr.bf16.mxu0 0
      %889 = vmatpush1.bf16.msra.mxu0 0
      %890 = vmatprep.subr.bf16.mxu0 0
      %891 = vmatpush1.bf16.msra.mxu0 0
      %892 = vmatprep.subr.bf16.mxu0 0
      %893 = vmatpush1.bf16.msra.mxu0 0
      %894 = vmatprep.subr.bf16.mxu0 0
      %895 = vmatpush1.bf16.msra.mxu0 0
      %896 = vmatprep.subr.bf16.mxu0 0
      %897 = vmatpush1.bf16.msra.mxu0 0
      %898 = vmatprep.subr.bf16.mxu0 0
      %899 = vmatpush1.bf16.msra.mxu0 0
      %900 = vmatprep.subr.bf16.mxu0 0
      %901 = vmatpush1.bf16.msra.mxu0 0
      %902 = vmatprep.subr.bf16.mxu0 0
      %903 = vmatpush1.bf16.msra.mxu0 0
      %904 = vmatprep.subr.bf16.mxu0 0
      %905 = vmatpush1.bf16.msra.mxu0 0
      %906 = vmatprep.subr.bf16.mxu0 0
      %907 = vmatpush1.bf16.msra.mxu0 0
      %908 = vmatprep.subr.bf16.mxu0 0
      %909 = vmatpush1.bf16.msra.mxu0 0
      %910 = vmatprep.subr.bf16.mxu0 0
      %911 = vmatpush1.bf16.msra.mxu0 0
      %912 = vmatprep.subr.bf16.mxu0 0
      %913 = vmatpush1.bf16.msra.mxu0 0
      %914 = vmatprep.mubr.bf16.mxu0 0
      %915 = vmatmul.mubr.bf16.gmra.mrb[0].mxu0 %v871
      %v916 = vpop.f32.mrb[0].mxu0
      %v917 = vadd.f32 0.0, %v916
      %v918 = vpop.f32.mrb[0].mxu0
      %v919 = vadd.f32 0.0, %v918
      %v920 = vpop.f32.mrb[0].mxu0
      %v921 = vpop.f32.mrb[0].mxu0
      %922 = vdwg.mxu0
      %923 = vmatprep.subr.bf16.mxu0 0
      %924 = vmatpush1.bf16.msra.mxu0 %v880
      %925 = vmatprep.subr.bf16.mxu0 0
      %926 = vmatpush1.bf16.msra.mxu0 0
      %927 = vmatprep.subr.bf16.mxu0 0
      %928 = vmatpush1.bf16.msra.mxu0 0
      %929 = vmatprep.subr.bf16.mxu0 0
      %930 = vmatpush1.bf16.msra.mxu0 0
      %931 = vmatprep.subr.bf16.mxu0 0
      %932 = vmatpush1.bf16.msra.mxu0 0
      %933 = vmatprep.subr.bf16.mxu0 0
      %934 = vmatpush1.bf16.msra.mxu0 0
      %935 = vmatprep.subr.bf16.mxu0 0
      %936 = vmatpush1.bf16.msra.mxu0 0
      %937 = vmatprep.subr.bf16.mxu0 0
      %938 = vmatpush1.bf16.msra.mxu0 0
      %939 = vmatprep.subr.bf16.mxu0 0
      %940 = vmatpush1.bf16.msra.mxu0 0
      %941 = vmatprep.subr.bf16.mxu0 0
      %942 = vmatpush1.bf16.msra.mxu0 0
      %943 = vmatprep.subr.bf16.mxu0 0
      %944 = vmatpush1.bf16.msra.mxu0 0
      %945 = vmatprep.subr.bf16.mxu0 0
      %946 = vmatpush1.bf16.msra.mxu0 0
      %947 = vmatprep.subr.bf16.mxu0 0
      %948 = vmatpush1.bf16.msra.mxu0 0
      %949 = vmatprep.subr.bf16.mxu0 0
      %950 = vmatpush1.bf16.msra.mxu0 0
      %951 = vmatprep.subr.bf16.mxu0 0
      %952 = vmatpush1.bf16.msra.mxu0 0
      %953 = vmatprep.subr.bf16.mxu0 0
      %954 = vmatpush1.bf16.msra.mxu0 0
      %955 = vmatprep.mubr.bf16.mxu0 0
      %956 = vmatmul.mubr.bf16.gmra.mrb[0].mxu0 %v871
      %v957 = vpop.f32.mrb[0].mxu0
      %v958 = vadd.f32 0.0, %v957
      %v959 = vpop.f32.mrb[0].mxu0
      %v960 = vpop.f32.mrb[0].mxu0
      %v961 = vpop.f32.mrb[0].mxu0
      %962 = vdwg.mxu0
      %v963 = vadd.f32 %v853, %v917
      %v964 = vadd.f32 %v854, %v919
      %v965 = vadd.f32 %v855, %v958
      %s966 = scalar_lea.vmem %s1, 28
      %v967 = vld [vmem:[%s966] sm:$0xf]
      %968 = vrot.lane.b32.xlu0 %v212, 89
      %v969 = vpop.permute.xlu0 %968
      %970 = vrot.lane.b32.xlu0 %v213, 89
      %v971 = vpop.permute.xlu0 %970
      %972 = vrot.lane.b32.xlu0 %v214, 89
      %v973 = vpop.permute.xlu0 %972
      %974 = vrot.lane.b32.xlu0 %v215, 89
      %v975 = vpop.permute.xlu0 %974
      %vm976 = vcmask 728064
      %v977 = vsel %vm976, %v969, %v971
      %v978 = vsel %vm976, %v971, %v973
      %v979 = vsel %vm976, %v973, %v975
      %v981 = vsel %vm228, %v967, 0
      %v984 = vsel %vm232, %v977, 0
      %v987 = vsel %vm232, %v978, 0
      %v990 = vsel %vm232, %v979, 0
      %992 = vmatprep.subr.bf16.mxu0 %v987
      %993 = vmatpush1.bf16.msra.mxu0 %v984
      %994 = vmatprep.subr.bf16.mxu0 0
      %995 = vmatpush1.bf16.msra.mxu0 0
      %996 = vmatprep.subr.bf16.mxu0 0
      %997 = vmatpush1.bf16.msra.mxu0 0
      %998 = vmatprep.subr.bf16.mxu0 0
      %999 = vmatpush1.bf16.msra.mxu0 0
      %1000 = vmatprep.subr.bf16.mxu0 0
      %1001 = vmatpush1.bf16.msra.mxu0 0
      %1002 = vmatprep.subr.bf16.mxu0 0
      %1003 = vmatpush1.bf16.msra.mxu0 0
      %1004 = vmatprep.subr.bf16.mxu0 0
      %1005 = vmatpush1.bf16.msra.mxu0 0
      %1006 = vmatprep.subr.bf16.mxu0 0
      %1007 = vmatpush1.bf16.msra.mxu0 0
      %1008 = vmatprep.subr.bf16.mxu0 0
      %1009 = vmatpush1.bf16.msra.mxu0 0
      %1010 = vmatprep.subr.bf16.mxu0 0
      %1011 = vmatpush1.bf16.msra.mxu0 0
      %1012 = vmatprep.subr.bf16.mxu0 0
      %1013 = vmatpush1.bf16.msra.mxu0 0
      %1014 = vmatprep.subr.bf16.mxu0 0
      %1015 = vmatpush1.bf16.msra.mxu0 0
      %1016 = vmatprep.subr.bf16.mxu0 0
      %1017 = vmatpush1.bf16.msra.mxu0 0
      %1018 = vmatprep.subr.bf16.mxu0 0
      %1019 = vmatpush1.bf16.msra.mxu0 0
      %1020 = vmatprep.subr.bf16.mxu0 0
      %1021 = vmatpush1.bf16.msra.mxu0 0
      %1022 = vmatprep.subr.bf16.mxu0 0
      %1023 = vmatpush1.bf16.msra.mxu0 0
      %1024 = vmatprep.mubr.bf16.mxu0 0
      %1025 = vmatmul.mubr.bf16.gmra.mrb[0].mxu0 %v981
      %v1026 = vpop.f32.mrb[0].mxu0
      %v1027 = vadd.f32 0.0, %v1026
      %v1028 = vpop.f32.mrb[0].mxu0
      %v1029 = vadd.f32 0.0, %v1028
      %v1030 = vpop.f32.mrb[0].mxu0
      %v1031 = vpop.f32.mrb[0].mxu0
      %1032 = vdwg.mxu0
      %1033 = vmatprep.subr.bf16.mxu0 0
      %1034 = vmatpush1.bf16.msra.mxu0 %v990
      %1035 = vmatprep.subr.bf16.mxu0 0
      %1036 = vmatpush1.bf16.msra.mxu0 0
      %1037 = vmatprep.subr.bf16.mxu0 0
      %1038 = vmatpush1.bf16.msra.mxu0 0
      %1039 = vmatprep.subr.bf16.mxu0 0
      %1040 = vmatpush1.bf16.msra.mxu0 0
      %1041 = vmatprep.subr.bf16.mxu0 0
      %1042 = vmatpush1.bf16.msra.mxu0 0
      %1043 = vmatprep.subr.bf16.mxu0 0
      %1044 = vmatpush1.bf16.msra.mxu0 0
      %1045 = vmatprep.subr.bf16.mxu0 0
      %1046 = vmatpush1.bf16.msra.mxu0 0
      %1047 = vmatprep.subr.bf16.mxu0 0
      %1048 = vmatpush1.bf16.msra.mxu0 0
      %1049 = vmatprep.subr.bf16.mxu0 0
      %1050 = vmatpush1.bf16.msra.mxu0 0
      %1051 = vmatprep.subr.bf16.mxu0 0
      %1052 = vmatpush1.bf16.msra.mxu0 0
      %1053 = vmatprep.subr.bf16.mxu0 0
      %1054 = vmatpush1.bf16.msra.mxu0 0
      %1055 = vmatprep.subr.bf16.mxu0 0
      %1056 = vmatpush1.bf16.msra.mxu0 0
      %1057 = vmatprep.subr.bf16.mxu0 0
      %1058 = vmatpush1.bf16.msra.mxu0 0
      %1059 = vmatprep.subr.bf16.mxu0 0
      %1060 = vmatpush1.bf16.msra.mxu0 0
      %1061 = vmatprep.subr.bf16.mxu0 0
      %1062 = vmatpush1.bf16.msra.mxu0 0
      %1063 = vmatprep.subr.bf16.mxu0 0
      %1064 = vmatpush1.bf16.msra.mxu0 0
      %1065 = vmatprep.mubr.bf16.mxu0 0
      %1066 = vmatmul.mubr.bf16.gmra.mrb[0].mxu0 %v981
      %v1067 = vpop.f32.mrb[0].mxu0
      %v1068 = vadd.f32 0.0, %v1067
      %v1069 = vpop.f32.mrb[0].mxu0
      %v1070 = vpop.f32.mrb[0].mxu0
      %v1071 = vpop.f32.mrb[0].mxu0
      %1072 = vdwg.mxu0
      %v1073 = vadd.f32 %v963, %v1027
      %v1074 = vadd.f32 %v964, %v1029
      %v1075 = vadd.f32 %v965, %v1068
      %s1076 = scalar_lea.vmem %s1, 32
      %v1077 = vld [vmem:[%s1076] sm:$0xf]
      %1078 = vrot.lane.b32.xlu0 %v212, 88
      %v1079 = vpop.permute.xlu0 %1078
      %1080 = vrot.lane.b32.xlu0 %v213, 88
      %v1081 = vpop.permute.xlu0 %1080
      %1082 = vrot.lane.b32.xlu0 %v214, 88
      %v1083 = vpop.permute.xlu0 %1082
      %1084 = vrot.lane.b32.xlu0 %v215, 88
      %v1085 = vpop.permute.xlu0 %1084
      %vm1086 = vcmask 719872
      %v1087 = vsel %vm1086, %v1079, %v1081
      %v1088 = vsel %vm1086, %v1081, %v1083
      %v1089 = vsel %vm1086, %v1083, %v1085
      %v1091 = vsel %vm228, %v1077, 0
      %v1094 = vsel %vm232, %v1087, 0
      %v1097 = vsel %vm232, %v1088, 0
      %v1100 = vsel %vm232, %v1089, 0
      %1102 = vmatprep.subr.bf16.mxu0 %v1097
      %1103 = vmatpush1.bf16.msra.mxu0 %v1094
      %1104 = vmatprep.subr.bf16.mxu0 0
      %1105 = vmatpush1.bf16.msra.mxu0 0
      %1106 = vmatprep.subr.bf16.mxu0 0
      %1107 = vmatpush1.bf16.msra.mxu0 0
      %1108 = vmatprep.subr.bf16.mxu0 0
      %1109 = vmatpush1.bf16.msra.mxu0 0
      %1110 = vmatprep.subr.bf16.mxu0 0
      %1111 = vmatpush1.bf16.msra.mxu0 0
      %1112 = vmatprep.subr.bf16.mxu0 0
      %1113 = vmatpush1.bf16.msra.mxu0 0
      %1114 = vmatprep.subr.bf16.mxu0 0
      %1115 = vmatpush1.bf16.msra.mxu0 0
      %1116 = vmatprep.subr.bf16.mxu0 0
      %1117 = vmatpush1.bf16.msra.mxu0 0
      %1118 = vmatprep.subr.bf16.mxu0 0
      %1119 = vmatpush1.bf16.msra.mxu0 0
      %1120 = vmatprep.subr.bf16.mxu0 0
      %1121 = vmatpush1.bf16.msra.mxu0 0
      %1122 = vmatprep.subr.bf16.mxu0 0
      %1123 = vmatpush1.bf16.msra.mxu0 0
      %1124 = vmatprep.subr.bf16.mxu0 0
      %1125 = vmatpush1.bf16.msra.mxu0 0
      %1126 = vmatprep.subr.bf16.mxu0 0
      %1127 = vmatpush1.bf16.msra.mxu0 0
      %1128 = vmatprep.subr.bf16.mxu0 0
      %1129 = vmatpush1.bf16.msra.mxu0 0
      %1130 = vmatprep.subr.bf16.mxu0 0
      %1131 = vmatpush1.bf16.msra.mxu0 0
      %1132 = vmatprep.subr.bf16.mxu0 0
      %1133 = vmatpush1.bf16.msra.mxu0 0
      %1134 = vmatprep.mubr.bf16.mxu0 0
      %1135 = vmatmul.mubr.bf16.gmra.mrb[0].mxu0 %v1091
      %v1136 = vpop.f32.mrb[0].mxu0
      %v1137 = vadd.f32 0.0, %v1136
      %v1138 = vpop.f32.mrb[0].mxu0
      %v1139 = vadd.f32 0.0, %v1138
      %v1140 = vpop.f32.mrb[0].mxu0
      %v1141 = vpop.f32.mrb[0].mxu0
      %1142 = vdwg.mxu0
      %1143 = vmatprep.subr.bf16.mxu0 0
      %1144 = vmatpush1.bf16.msra.mxu0 %v1100
      %1145 = vmatprep.subr.bf16.mxu0 0
      %1146 = vmatpush1.bf16.msra.mxu0 0
      %1147 = vmatprep.subr.bf16.mxu0 0
      %1148 = vmatpush1.bf16.msra.mxu0 0
      %1149 = vmatprep.subr.bf16.mxu0 0
      %1150 = vmatpush1.bf16.msra.mxu0 0
      %1151 = vmatprep.subr.bf16.mxu0 0
      %1152 = vmatpush1.bf16.msra.mxu0 0
      %1153 = vmatprep.subr.bf16.mxu0 0
      %1154 = vmatpush1.bf16.msra.mxu0 0
      %1155 = vmatprep.subr.bf16.mxu0 0
      %1156 = vmatpush1.bf16.msra.mxu0 0
      %1157 = vmatprep.subr.bf16.mxu0 0
      %1158 = vmatpush1.bf16.msra.mxu0 0
      %1159 = vmatprep.subr.bf16.mxu0 0
      %1160 = vmatpush1.bf16.msra.mxu0 0
      %1161 = vmatprep.subr.bf16.mxu0 0
      %1162 = vmatpush1.bf16.msra.mxu0 0
      %1163 = vmatprep.subr.bf16.mxu0 0
      %1164 = vmatpush1.bf16.msra.mxu0 0
      %1165 = vmatprep.subr.bf16.mxu0 0
      %1166 = vmatpush1.bf16.msra.mxu0 0
      %1167 = vmatprep.subr.bf16.mxu0 0
      %1168 = vmatpush1.bf16.msra.mxu0 0
      %1169 = vmatprep.subr.bf16.mxu0 0
      %1170 = vmatpush1.bf16.msra.mxu0 0
      %1171 = vmatprep.subr.bf16.mxu0 0
      %1172 = vmatpush1.bf16.msra.mxu0 0
      %1173 = vmatprep.subr.bf16.mxu0 0
      %1174 = vmatpush1.bf16.msra.mxu0 0
      %1175 = vmatprep.mubr.bf16.mxu0 0
      %1176 = vmatmul.mubr.bf16.gmra.mrb[0].mxu0 %v1091
      %v1177 = vpop.f32.mrb[0].mxu0
      %v1178 = vadd.f32 0.0, %v1177
      %v1179 = vpop.f32.mrb[0].mxu0
      %v1180 = vpop.f32.mrb[0].mxu0
      %v1181 = vpop.f32.mrb[0].mxu0
      %1182 = vdwg.mxu0
      %v1183 = vadd.f32 %v1073, %v1137
      %v1184 = vadd.f32 %v1074, %v1139
      %v1185 = vadd.f32 %v1075, %v1178
      %1187 = vset.pattern.permute.xlu0 0
      %1188 = vperm.xlu0 %1187, %v202
      %v1189 = vpop.permute.xlu0 %1188
      %v1191 = vadd.f32 %v1183, %v1189
      %v1192 = vadd.f32 %v1184, %v1189
      %v1193 = vadd.f32 %v1185, %v1189
      %1194 = vst [vmem:[%s192] sm:$0xff] %v1191
      %1195 = vst [vmem:[%s192 + $0x8] sm:$0xff] %v1192
      %1196 = vst [vmem:[%s192 + $0x10] sm:$0xff] %v1193
      %s1197 = smul.u32 3, %s19
      %p1198 = scmp.lt.s32.totalorder %s18, 1
      %s1199 = scalar_select %p1198, %s18, 1
      %p1200 = scmp.lt.s32.totalorder %s1197, 2
      %s1201 = scalar_select %p1200, %s1197, 2
      %s1202 = smul.addr %s1199, 3
      %s1203 = sadd.s32 %s1201, %s1202
      %s1204 = smul.addr %s1203, 8
      %s1205 = scalar_lea.vmem %s3, %s1204
      // Predicated region
      $region33: #{conv2dt_forward.1} parent=31 // pred_check
        %p1206 = pneg %p114
      $region34: #{conv2dt_forward.1} parent=31 // pred_check_branch
        %1208 = sbr.rel (%p1206) target = $region36
      $region35: #{conv2dt_forward.1} parent=31 // pred_region
        %s1209 = smul.u32 3, %s19
      $region36: #{conv2dt_forward.1} parent=31 // pred_fallthru
        _
    $region32: #{conv2dt_forward.1} parent=5 // pred_fallthru
      _
    %p1210 = scmp.le.s32.totalorder 2, %s9
    // Predicated region
    $region37: #{conv2dt_forward.1} parent=5 // pred_check
      %p1211 = pneg %p1210
    $region38: #{conv2dt_forward.1} parent=5 // pred_check_branch
      %1213 = sbr.rel (%p1211) target = $region40
    $region39: #{conv2dt_forward.1} parent=5 // pred_region
      %s1214 = ssub.s32 %s9, 2
      // Predicated region
      $region41: #{conv2dt_forward.1} parent=39 // pred_check
        %p1215 = pneg %p120
      $region42: #{conv2dt_forward.1} parent=39 // pred_check_branch
        %1217 = sbr.rel (%p1215) target = $region44
      $region43: #{conv2dt_forward.1} parent=39 // pred_region
        %s1218 = smul.u32 3, %s21
        %p1219 = scmp.lt.s32.totalorder %s20, 1
        %s1220 = scalar_select %p1219, %s20, 1
        %p1221 = scmp.lt.s32.totalorder %s1218, 2
        %s1222 = scalar_select %p1221, %s1218, 2
        %s1223 = smul.addr %s1220, 3
        %s1224 = sadd.s32 %s1222, %s1223
        %s1225 = smul.addr %s1224, 8
        %s1226 = scalar_lea.vmem %s3, %s1225
      $region44: #{conv2dt_forward.1} parent=39 // pred_fallthru
        _
    $region40: #{conv2dt_forward.1} parent=5 // pred_fallthru
      _
  $region6: #{conv2dt_forward.1} parent=0 // loop_footer
    %s13 = sadd.s32 1, %s9
  $region7: #{conv2dt_forward.1} parent=0 // loop_footer_branch
    %8 = sbr.rel target = $region3
  $region8: #{conv2dt_forward.1} parent=0 // loop_exit
    _

</llo_original>
